<compile_context>
chip_gen: v6e
topology: v6e:2x2x1
jax: 0.10.0
libtpu: 0.0.40
codegen_flags: <defaults>
</compile_context>

<pallas_src>
import functools

import jax
import jax.numpy as jnp
from jax.experimental import pallas as pl
from jax.experimental.pallas import tpu as pltpu


_STRIP_BASE = 256                      # rows per in-kernel compute strip (mult of 8/16/32)
_PER_TC_VMEM_CAP = 64 * 1024 * 1024    # conservative per-TensorCore VMEM (v7x floor)


def rmsnorm_kernel(x_ref, w_ref, o_ref, *, eps: float, strip_rows: int,
                   num_strips: int):
    # x_ref: (tile_rows, dim) input block (any float dtype)
    # w_ref: (1, dim) weight; constant index_map -> resident in VMEM
    # o_ref: (tile_rows, dim) output block, same dtype as input
    dim = x_ref.shape[-1]
    # Hoisted out of the strip loop (JAX does not CSE broadcasts).
    w = w_ref[...].astype(jnp.float32)                    # (1, dim)
    ones_col = jnp.ones((dim, 1), dtype=jnp.float32)      # MXU reduction RHS
    inv_dim = 1.0 / dim

    # Process the DMA block in fixed-size strips so the f32 intermediates only
    # ever exist at strip granularity (DMA block size decoupled from compute
    # working set).
    @pl.loop(0, num_strips)
    def _(s):
        r0 = s * strip_rows
        if strip_rows % 8 == 0:
            r0 = pl.multiple_of(r0, strip_rows)
        x = x_ref[pl.ds(r0, strip_rows), :].astype(jnp.float32)   # x.float()
        # mean(x*x, dim=-1): row-wise sum of squares on the otherwise-idle MXU.
        sumsq = jnp.dot(x * x, ones_col, preferred_element_type=jnp.float32)
        inv = jax.lax.rsqrt(sumsq * inv_dim + eps)                # EUP rsqrt
        # Match PyTorch: weight * x_normed in f32, then cast back to input dtype.
        o_ref[pl.ds(r0, strip_rows), :] = (w * (x * inv)).astype(o_ref.dtype)


def _vmem_capacity_bytes() -> int:
    """Per-TensorCore VMEM budget.

    get_tpu_info() can report a chip-level figure; clamp to 64 MiB (v7x per-TC
    capacity) so the budget can never oversubscribe a core.  For a streaming
    kernel, a 32 MiB tile budget is already past diminishing returns on every
    generation, so the clamp is harmless on v5e/v6e (128 MiB per core).
    """
    try:
        cap = int(pltpu.get_tpu_info().vmem_capacity_bytes)
    except Exception:
        cap = _PER_TC_VMEM_CAP
    return min(cap, _PER_TC_VMEM_CAP)


def _choose_tiling(rows: int, dim: int, itemsize: int, vmem_cap: int):
    """Returns (tile_rows, strip_rows).

    tile_rows: DMA block rows (in+out double-buffered fits ~half VMEM).
    strip_rows: in-kernel compute strip (3 strip-sized f32 temps fit ~1/8 VMEM).
    """
    pack = max(8, 32 // itemsize)          # sublane pack: f32->8, bf16->16, int8->32
    # Strip size bounds the f32 intermediates.
    strip = (vmem_cap // 8) // max(12 * dim, 1) // pack * pack
    strip = max(pack, min(_STRIP_BASE, strip))
    if rows <= strip:
        return rows, rows                  # tiny input: one full-extent block
    # Tile size from the double-buffered in/out DMA blocks only.
    t = (vmem_cap // 2) // max(4 * itemsize * dim, 1) // strip * strip
    t = max(strip, t)
    # Keep the grid at >= 2 steps so v7x's two TensorCores both get work.
    half = ((rows + 1) // 2 + strip - 1) // strip * strip
    floor_rows = (rows // strip) * strip
    return min(t, half, floor_rows), strip


def rmsnorm(x: jax.Array, weight: jax.Array, eps: float = 1e-5,
            tile_rows: int | None = None) -> jax.Array:
    """RMSNorm over the last axis of x, matching the PyTorch module semantics."""
    orig_shape = x.shape
    dim = orig_shape[-1]
    x2d = x.reshape(-1, dim)               # no data movement; dim stays the lane axis
    rows = x2d.shape[0]
    w2d = weight.reshape(1, dim)

    itemsize = jnp.dtype(x.dtype).itemsize
    vmem_cap = _vmem_capacity_bytes()

    if tile_rows is None:
        tile_rows, strip_rows = _choose_tiling(rows, dim, itemsize, vmem_cap)
    else:
        tile_rows = int(min(tile_rows, rows))
        if tile_rows >= rows:
            tile_rows, strip_rows = rows, rows
        else:
            strip_rows = min(_STRIP_BASE, tile_rows)
            tile_rows = max((tile_rows // strip_rows) * strip_rows, strip_rows)
    num_strips = max(1, tile_rows // strip_rows)

    grid = (pl.cdiv(rows, tile_rows),)     # partial last block is masked by Pallas

    # VMEM limit: double-buffered in+out blocks, strip-sized f32 temps, weight, slack.
    block_bytes = tile_rows * dim * itemsize
    strip_bytes = 3 * strip_rows * dim * 4
    needed = 4 * block_bytes + strip_bytes + 2 * dim * 4 + (4 << 20)
    vmem_limit = int(min(int(0.9 * vmem_cap), max(needed, 32 << 20)))

    kernel = functools.partial(rmsnorm_kernel, eps=eps, strip_rows=strip_rows,
                               num_strips=num_strips)

    out = pl.pallas_call(
        kernel,
        out_shape=jax.ShapeDtypeStruct((rows, dim), x.dtype),
        grid_spec=pltpu.PrefetchScalarGridSpec(
            num_scalar_prefetch=0,
            grid=grid,
            in_specs=[
                pl.BlockSpec((tile_rows, dim), lambda i: (i, 0)),
                pl.BlockSpec((1, dim), lambda i: (0, 0)),
            ],
            out_specs=pl.BlockSpec((tile_rows, dim), lambda i: (i, 0)),
        ),
        compiler_params=pltpu.CompilerParams(
            dimension_semantics=("parallel",),   # v7x: shard the row grid over both TCs
            vmem_limit_bytes=vmem_limit,
        ),
    )(x2d, w2d)

    return out.reshape(orig_shape)


if __name__ == "__main__":
    key = jax.random.PRNGKey(0)
    kx, kw, kx2 = jax.random.split(key, 3)

    def ref_rmsnorm(x, w, eps):
        xf = x.astype(jnp.float32)
        inv = jax.lax.rsqrt(jnp.mean(xf * xf, axis=-1, keepdims=True) + eps)
        return (w.astype(jnp.float32) * (xf * inv)).astype(x.dtype)

    eps = 1e-5

    # 1) Module-shaped smoke test: batch=2, seq=8, hidden=32; PyTorch init weight=ones.
    batch, seq, hidden = 2, 8, 32
    weight = jnp.ones((hidden,), dtype=jnp.float32)
    x = jax.random.normal(kx, (batch, seq, hidden), dtype=jnp.bfloat16)
    out = jax.block_until_ready(rmsnorm(x, weight, eps=eps))
    assert out.shape == x.shape and out.dtype == x.dtype
    assert jnp.allclose(out.astype(jnp.float32),
                        ref_rmsnorm(x, weight, eps).astype(jnp.float32),
                        atol=1e-2, rtol=1e-2)

    # 2) Multi-tile grid with a masked partial last block and non-trivial weight
    #    (21 rows, explicit 8-row tile -> grid of 3).
    w2 = jax.random.normal(kw, (hidden,), dtype=jnp.float32)
    x2 = jax.random.normal(kx, (3, 7, hidden), dtype=jnp.bfloat16)
    out2 = jax.block_until_ready(rmsnorm(x2, w2, eps=eps, tile_rows=8))
    assert out2.shape == x2.shape and out2.dtype == x2.dtype
    assert jnp.allclose(out2.astype(jnp.float32),
                        ref_rmsnorm(x2, w2, eps).astype(jnp.float32),
                        atol=1e-2, rtol=1e-2)

    # 3) Auto-tiling path with >1 grid step and >1 in-kernel strip
    #    (640 rows, dim=128 -> tile=512, strip=256, grid=2 with masked tail).
    hidden3 = 128
    w3 = jax.random.normal(kw, (hidden3,), dtype=jnp.float32)
    x3 = jax.random.normal(kx2, (2, 320, hidden3), dtype=jnp.bfloat16)
    out3 = jax.block_until_ready(rmsnorm(x3, w3, eps=eps))
    assert out3.shape == x3.shape and out3.dtype == x3.dtype
    assert jnp.allclose(out3.astype(jnp.float32),
                        ref_rmsnorm(x3, w3, eps).astype(jnp.float32),
                        atol=1e-2, rtol=1e-2)

    print("KERNEL_OK")
</pallas_src>

<mosaic_0001>
module attributes {stable_mosaic.version = 11 : i64} {
  func.func @rmsnorm_kernel(%arg0: i32, %arg1: memref<16x32xbf16, #tpu.memory_space<vmem>>, %arg2: memref<1x32xf32, #tpu.memory_space<vmem>>, %arg3: memref<16x32xbf16, #tpu.memory_space<vmem>>) attributes {dimension_semantics = [#tpu.dimension_semantics<parallel>], iteration_bounds = array<i64: 1>, scalar_prefetch = 0 : i64, scratch_operands = 0 : i64, tpu.core_type = #tpu.core_type<tc>, window_params = [{transform_indices = @transform_0, window_bounds = array<i64: 16, 32>}, {pipeline_mode = #tpu.pipeline_mode<synchronous>, transform_indices = @transform_1, window_bounds = array<i64: 1, 32>}, {transform_indices = @transform_2, window_bounds = array<i64: 16, 32>}]} {
    %c0 = arith.constant 0 : index
    %c0_0 = arith.constant 0 : index
    %0 = vector.load %arg2[%c0, %c0_0] : memref<1x32xf32, #tpu.memory_space<vmem>>, vector<1x32xf32>
    %cst = arith.constant 1.000000e+00 : f32
    %1 = vector.broadcast %cst : f32 to vector<32x1xf32>
    %c0_i32 = arith.constant 0 : i32
    %c1_i32 = arith.constant 1 : i32
    %2 = arith.muli %c0_i32, %c1_i32 : i32
    %c0_i32_1 = arith.constant 0 : i32
    %3 = arith.addi %c0_i32_1, %2 : i32
    %c16_i32 = arith.constant 16 : i32
    %4 = arith.muli %3, %c16_i32 : i32
    %5 = tpu.assume_multiple %4, 16 : i32
    %6 = arith.index_cast %5 : i32 to index
    %c0_2 = arith.constant 0 : index
    %7 = vector.load %arg1[%6, %c0_2] : memref<16x32xbf16, #tpu.memory_space<vmem>>, vector<16x32xbf16>
    %8 = arith.extf %7 : vector<16x32xbf16> to vector<16x32xf32>
    %9 = arith.mulf %8, %8 : vector<16x32xf32>
    %cst_3 = arith.constant dense<0.000000e+00> : vector<16x1xf32>
    %10 = tpu.matmul %9, %1, %cst_3 {dimension_numbers = #tpu.dot_dimension_numbers<[1], [0], [0], [1], [0, 0, 1, 1], [], []>} : vector<16x32xf32>, vector<32x1xf32>, vector<16x1xf32> -> vector<16x1xf32>
    %cst_4 = arith.constant 3.125000e-02 : f32
    %11 = vector.broadcast %cst_4 : f32 to vector<16x1xf32>
    %12 = arith.mulf %10, %11 : vector<16x1xf32>
    %cst_5 = arith.constant 9.99999974E-6 : f32
    %13 = vector.broadcast %cst_5 : f32 to vector<16x1xf32>
    %14 = arith.addf %12, %13 : vector<16x1xf32>
    %15 = math.rsqrt %14 : vector<16x1xf32>
    %16 = vector.broadcast %15 : vector<16x1xf32> to vector<16x32xf32>
    %17 = arith.mulf %8, %16 : vector<16x32xf32>
    %18 = vector.broadcast %0 : vector<1x32xf32> to vector<16x32xf32>
    %19 = arith.mulf %18, %17 : vector<16x32xf32>
    %20 = arith.truncf %19 : vector<16x32xf32> to vector<16x32xbf16>
    %21 = arith.index_cast %5 : i32 to index
    %c0_6 = arith.constant 0 : index
    %22 = vector.load %arg3[%21, %c0_6] : memref<16x32xbf16, #tpu.memory_space<vmem>>, vector<16x32xbf16>
    tpu.vector_store %arg3[%21, %c0_6], %20 {strides = array<i32>} : memref<16x32xbf16, #tpu.memory_space<vmem>>, vector<16x32xbf16>,
    %c1_i32_7 = arith.constant 1 : i32
    return
  }
  func.func @transform_0(%arg0: i32) -> (i32, i32) {
    %c0_i32 = arith.constant 0 : i32
    %c0_i32_0 = arith.constant 0 : i32
    return %arg0, %c0_i32 : i32, i32
  }
  func.func @transform_1(%arg0: i32) -> (i32, i32) {
    %c0_i32 = arith.constant 0 : i32
    %c0_i32_0 = arith.constant 0 : i32
    %c0_i32_1 = arith.constant 0 : i32
    return %c0_i32, %c0_i32_0 : i32, i32
  }
  func.func @transform_2(%arg0: i32) -> (i32, i32) {
    %c0_i32 = arith.constant 0 : i32
    %c0_i32_0 = arith.constant 0 : i32
    return %arg0, %c0_i32 : i32, i32
  }
}

</mosaic_0001>

<llo_original>
// kernel: tpu_custom_call.1
$region0: #{tpu_custom_call.1}
  #allocation0 [shape = 'u32[]', space=smem, size = 0x4, offset = 0x4, fixed_abs, tag = 'smem constant byte address 0x4 - core index']
  #allocation1 [shape = 'u32[144,128]{1,0:T(1,128)}', space=vmem, size = 0x12000, scoped, tag = 'internal scratch']
  %s0 = inlined_call_operand.hbm [shape: bf16[16,32], index: 0, kind: input, shape index: {}]
  %s1 = inlined_call_operand.vmem [shape: f32[1,32], index: 1, kind: input, shape index: {}]
  %s2 = inlined_call_operand.hbm [shape: bf16[16,32], index: 2, kind: output, shape index: {}]
  %s3 = sld [smem:[#allocation0]]
  $region22: #{tpu_custom_call.1} parent=0
    _
  %s5 = ssub.s32 1, %s3
  %s6 = scalar_select 0, %s5, %s3
  $region1: #{tpu_custom_call.1} parent=0
    #allocation2 [shape = 'u8[4096]{0}', space=vmem, size = 0x1000, scoped, tag = 'input window, operand 0, single buffered']
    #allocation3 [shape = 's32[1]{0}', space=sflag, size = 0x4, scoped, tag = 'scoped memory for tpu_custom_call.1']
    #allocation4 [shape = 's32[1]{0}', space=sflag, size = 0x4, scoped, tag = 'scoped memory for tpu_custom_call.1']
    #allocation5 [shape = 'u8[4096]{0}', space=vmem, size = 0x1000, scoped, tag = 'output window, operand 0, single buffered']
    %7 = vsyncpa [#allocation3], 0
    %8 = vsyncpa [#allocation4], 0
    // Predicated region
    $region2: #{tpu_custom_call.1} parent=1 // pred_check
      _
    $region3: #{tpu_custom_call.1} parent=1 // pred_check_branch
      %10 = sbr.rel (0) target = $region5
    $region4: #{tpu_custom_call.1} parent=1 // pred_region
      %s12 = ssub.s32 128, 128
      %13 = vsyncadd [#allocation3], %s12
      %s14 = sshll.u32 [#allocation2], 4
      %s15 = int_to_ptr.vmem [resolvable:$true] %s14
      %20 = dma.hbm_to_vmem [thread:$0]  %s0, 128, %s15, [#allocation3], 64, 64, 4
    $region5: #{tpu_custom_call.1} parent=1 // pred_fallthru
      _
    // Predicated region
    $region6: #{tpu_custom_call.1} parent=1 // pred_check
      _
    $region7: #{tpu_custom_call.1} parent=1 // pred_check_branch
      %22 = sbr.rel (0) target = $region9
    $region8: #{tpu_custom_call.1} parent=1 // pred_region
      _
    $region9: #{tpu_custom_call.1} parent=1 // pred_fallthru
      _
    // Predicated region
    $region10: #{tpu_custom_call.1} parent=1 // pred_check
      _
    $region11: #{tpu_custom_call.1} parent=1 // pred_check_branch
      %24 = sbr.rel (0) target = $region13
    $region12: #{tpu_custom_call.1} parent=1 // pred_region
      %25 = dma.done [#allocation3], 128
    $region13: #{tpu_custom_call.1} parent=1 // pred_fallthru
      _
    %v26 = vld [vmem:[%s1] sm:$0x1]
    %v27 = vld [vmem:[#allocation2] sm:$0xf]
    %v28 = vld [vmem:[#allocation2 + $0x4] sm:$0xf]
    %v29 = vunpack.c.l.bf16 %v27
    %v30 = vunpack.c.l.bf16 %v28
    %v31 = vmul.f32 %v29, %v29
    %v32 = vmul.f32 %v30, %v30
    %vm33 = vcmask 261120
    %v35 = vsel %vm33, %v31, 0
    %v38 = vsel %vm33, %v32, 0
    %40 = vmatprep.subr.mxu0 0.0
    %41 = vmatpush1.msra.mxu0 0.0
    %42 = vmatprep.subr.mxu0 0.0
    %43 = vmatpush1.msra.mxu0 0.0
    %44 = vmatprep.subr.mxu0 0.0
    %45 = vmatpush1.msra.mxu0 0.0
    %46 = vmatprep.subr.mxu0 0.0
    %47 = vmatpush1.msra.mxu0 0.0
    %48 = vmatprep.subr.mxu0 0.0
    %49 = vmatpush1.msra.mxu0 0.0
    %50 = vmatprep.subr.mxu0 0.0
    %51 = vmatpush1.msra.mxu0 0.0
    %52 = vmatprep.subr.mxu0 0.0
    %53 = vmatpush1.msra.mxu0 0.0
    %54 = vmatprep.subr.mxu0 0.0
    %55 = vmatpush1.msra.mxu0 0.0
    %56 = vmatprep.subr.mxu0 0.0
    %57 = vmatpush1.msra.mxu0 0.0
    %58 = vmatprep.subr.mxu0 0.0
    %59 = vmatpush1.msra.mxu0 0.0
    %60 = vmatprep.subr.mxu0 0.0
    %61 = vmatpush1.msra.mxu0 0.0
    %62 = vmatprep.subr.mxu0 0.0
    %63 = vmatpush1.msra.mxu0 0.0
    %64 = vmatprep.subr.mxu0 0.0
    %65 = vmatpush1.msra.mxu0 1.0
    %66 = vmatprep.subr.mxu0 0.0
    %67 = vmatpush1.msra.mxu0 1.0
    %68 = vmatprep.subr.mxu0 0.0
    %69 = vmatpush1.msra.mxu0 1.0
    %70 = vmatprep.subr.mxu0 0.0
    %71 = vmatpush1.msra.mxu0 1.0
    %72 = vmatprep.subr.mxu0 0.0
    %73 = vmatpush2.msra.mxu0 0.0
    %74 = vmatprep.subr.mxu0 0.0
    %75 = vmatpush2.msra.mxu0 0.0
    %76 = vmatprep.subr.mxu0 0.0
    %77 = vmatpush2.msra.mxu0 0.0
    %78 = vmatprep.subr.mxu0 0.0
    %79 = vmatpush2.msra.mxu0 0.0
    %80 = vmatprep.subr.mxu0 0.0
    %81 = vmatpush2.msra.mxu0 0.0
    %82 = vmatprep.subr.mxu0 0.0
    %83 = vmatpush2.msra.mxu0 0.0
    %84 = vmatprep.subr.mxu0 0.0
    %85 = vmatpush2.msra.mxu0 0.0
    %86 = vmatprep.subr.mxu0 0.0
    %87 = vmatpush2.msra.mxu0 0.0
    %88 = vmatprep.subr.mxu0 0.0
    %89 = vmatpush2.msra.mxu0 0.0
    %90 = vmatprep.subr.mxu0 0.0
    %91 = vmatpush2.msra.mxu0 0.0
    %92 = vmatprep.subr.mxu0 0.0
    %93 = vmatpush2.msra.mxu0 0.0
    %94 = vmatprep.subr.mxu0 0.0
    %95 = vmatpush2.msra.mxu0 0.0
    %96 = vmatprep.subr.mxu0 0.0
    %97 = vmatpush2.msra.mxu0 0.0
    %98 = vmatprep.subr.mxu0 0.0
    %99 = vmatpush2.msra.mxu0 0.0
    %100 = vmatprep.subr.mxu0 0.0
    %101 = vmatpush2.msra.mxu0 0.0
    %102 = vmatprep.subr.mxu0 0.0
    %103 = vmatpush2.msra.mxu0 0.0
    %104 = vmatprep.mubr.f32.mxu0 0.0
    %105 = vmatmul.mubr.f32.gmra.mxu0 %v35
    %v106 = vpop.f32.mrf.mxu0
    %v107 = vadd.f32 0.0, %v106
    %v108 = vpop.f32.mrf.mxu0
    %109 = vmatprep.mubr.f32.mxu0 0.0
    %110 = vmatmul.mubr.f32.gmra.mxu0 %v38
    %v111 = vpop.f32.mrf.mxu0
    %v112 = vadd.f32 0.0, %v111
    %v113 = vpop.f32.mrf.mxu0
    %114 = vdwg.mxu0
    %v115 = vmul.f32 %v107, 0.03125
    %v116 = vmul.f32 %v112, 0.03125
    %v117 = vadd.f32 %v115, 1e-05
    %v118 = vadd.f32 %v116, 1e-05
    %v119 = vrsqrt.pop %v117
    %v120 = vrsqrt.pop %v118
    %122 = vset.pattern.permute.xlu0 0
    %123 = vperm.xlu0 %122, %v119
    %v124 = vpop.permute.xlu0 %123
    %127 = vset.pattern.permute.xlu0 0
    %128 = vperm.xlu0 %127, %v120
    %v129 = vpop.permute.xlu0 %128
    %v131 = vmul.f32 %v29, %v124
    %v132 = vmul.f32 %v30, %v129
    %v134 = vlaneseq
    %v135 = vshrl.u32 %v134, 7
    %v136 = vsub.s32 0, %v135
    %v137 = vrot.slane %v26, %v136
    %v139 = vmul.f32 %v137, %v131
    %v140 = vmul.f32 %v137, %v132
    %v141 = vpack.c.bf16 %v140, %v139
    %v143 = vunpack.c.l.b16 %v141
    %v144 = vunpack.c.h.b16 %v141
    %v145 = vpack.c.b16 %v143, %v143
    %v146 = vpack.c.b16 %v144, %v144
    %vm149 = vcmask 257024
    %150 = vst.msk [vmem:[#allocation5] sm:$0xf] %vm149, %v145
    %151 = vst.msk [vmem:[#allocation5 + $0x4] sm:$0xf] %vm149, %v146
    // Predicated region
    $region14: #{tpu_custom_call.1} parent=1 // pred_check
      _
    $region15: #{tpu_custom_call.1} parent=1 // pred_check_branch
      %153 = sbr.rel (0) target = $region17
    $region16: #{tpu_custom_call.1} parent=1 // pred_region
      %s155 = ssub.s32 128, 128
      %156 = vsyncadd [#allocation4], %s155
      %s157 = sshll.u32 [#allocation5], 4
      %s158 = int_to_ptr.vmem [resolvable:$true] %s157
      %163 = dma.vmem_to_hbm [thread:$0]  %s158, 128, %s2, [#allocation4], 64, 64, 4
    $region17: #{tpu_custom_call.1} parent=1 // pred_fallthru
      _
    // Predicated region
    $region18: #{tpu_custom_call.1} parent=1 // pred_check
      _
    $region19: #{tpu_custom_call.1} parent=1 // pred_check_branch
      %165 = sbr.rel (0) target = $region21
    $region20: #{tpu_custom_call.1} parent=1 // pred_region
      %166 = dma.done [#allocation4], 128
    $region21: #{tpu_custom_call.1} parent=1 // pred_fallthru
      _
    %167 = vsyncpa [#allocation3], 1
    %168 = vsyncpa [#allocation4], 1

</llo_original>
